<compile_context>
chip_gen: v6e
topology: v6e:2x2x1
jax: 0.10.0
libtpu: 0.0.40
codegen_flags: <defaults>
</compile_context>

<pallas_src>
import functools

import jax
import jax.numpy as jnp
from jax.experimental import pallas as pl
from jax.experimental.pallas import tpu as pltpu


def _round_up(x, m):
    return (x + m - 1) // m * m


def _v_pad(vocab_size):
    """Tight lane-dense vocab padding (multiple of 128)."""
    return _round_up(vocab_size, 128)


def _select_tiles(M, E, v_pad, budget_bytes=40 * 1024 * 1024):
    """Pick (tm, tn, vmem_limit_bytes).

    Working set = double-buffered bf16 x tile + bf16 w tile + f32 bias tile +
    f32 out tile; keep >=25% headroom vs. `budget_bytes` and cap the scoped
    VMEM limit at 48 MiB so it is safe on v7x (64 MiB physical) while still
    allowing large tiles on v5e/v6e.
    """
    def working_set(tm, tn):
        x_b = 2 * tm * E * 2          # bf16 activation, double-buffered
        w_b = 2 * E * tn * 2          # bf16 weight, double-buffered
        b_b = 2 * tn * 4              # f32 bias, double-buffered
        o_b = 2 * tm * tn * 4         # f32 output, double-buffered
        return x_b + w_b + b_b + o_b

    m_cap = _round_up(min(M, 512), 8)
    tn_candidates = [t for t in (1024, 512, 256, 128) if v_pad % t == 0]
    tm_candidates = (512, 256, 128, 64, 32, 16, 8)

    for tn in tn_candidates:
        for tm_c in tm_candidates:
            tm = _round_up(min(tm_c, m_cap), 8)
            ws = working_set(tm, tn)
            if ws * 5 <= budget_bytes * 4:          # ws * 1.25 <= budget
                vmem_limit = int(min(max(ws * 3 // 2, 16 * 1024 * 1024),
                                     48 * 1024 * 1024))
                return tm, tn, vmem_limit

    # Fallback: smallest legal tiles.
    tm, tn = 8, 128
    ws = working_set(tm, tn)
    return tm, tn, int(min(max(ws * 2, 16 * 1024 * 1024), 48 * 1024 * 1024))


def _lm_head_kernel(x_ref, w_ref, b_ref, o_ref):
    # x_ref: (tm, E) bf16   w_ref: (E, tn) bf16   b_ref: (1, tn) f32
    # o_ref: (tm, tn) f32
    acc = jnp.dot(x_ref[...], w_ref[...], preferred_element_type=jnp.float32)
    o_ref[...] = acc + b_ref[...]          # (1, tn) broadcasts over tm rows


def prepare_lm_head(lm_w, lm_b, compute_dtype=jnp.bfloat16):
    """One-time layout prep (do at init, NOT per forward call):
       transpose the PyTorch (V, E) weight to (E, V), cast to bf16, and pad
       the vocab dim to the tight lane-dense multiple of 128."""
    V, _E = lm_w.shape
    v_pad = _v_pad(V)
    w = lm_w.T.astype(compute_dtype)                       # (E, V)
    b = lm_b.astype(jnp.float32)
    if v_pad > V:
        w = jnp.pad(w, ((0, 0), (0, v_pad - V)))
        b = jnp.pad(b, (0, v_pad - V))
    return w, b.reshape(1, v_pad)


def minigpt_forward(idx, tok_table, pos_table, w_prep, b_prep, *, vocab_size):
    """idx: (B, T) int32.  Returns logits (B, T, vocab_size) float32."""
    B, T = idx.shape
    E = tok_table.shape[1]
    block_size = pos_table.shape[0]
    if T > block_size:
        raise ValueError(f"sequence length {T} exceeds block_size {block_size}")
    v_pad = w_prep.shape[1]

    # --- glue: token gather + position add; cast activations to bf16 once ---
    tok = jnp.take(tok_table, idx, axis=0)                     # (B, T, E)
    x = (tok + pos_table[:T][None, :, :]).astype(jnp.bfloat16)
    M = B * T
    x = x.reshape(M, E)

    tm, tn, vmem_limit = _select_tiles(M, E, v_pad)
    m_pad = _round_up(M, tm)
    if m_pad > M:
        x = jnp.pad(x, ((0, m_pad - M), (0, 0)))

    # V outer (slow, core-sharded) / M inner: the weight block index changes
    # only on the outer axis -> full weight streamed from HBM exactly once.
    grid = (v_pad // tn, m_pad // tm)

    out = pl.pallas_call(
        _lm_head_kernel,
        out_shape=jax.ShapeDtypeStruct((m_pad, v_pad), jnp.float32),
        grid=grid,
        in_specs=[
            pl.BlockSpec((tm, E), lambda j, i: (i, 0)),    # bf16 activation tile
            pl.BlockSpec((E, tn), lambda j, i: (0, j)),    # bf16 (E, V) weight tile
            pl.BlockSpec((1, tn), lambda j, i: (0, j)),    # f32 bias tile
        ],
        out_specs=pl.BlockSpec((tm, tn), lambda j, i: (i, j)),
        compiler_params=pltpu.CompilerParams(
            dimension_semantics=("parallel", "parallel"),
            vmem_limit_bytes=vmem_limit,
        ),
    )(x, w_prep, b_prep)

    if m_pad > M or v_pad > vocab_size:
        out = out[:M, :vocab_size]
    return out.reshape(B, T, vocab_size)


def init_params(key, vocab_size, block_size, embedding_dim):
    """Deterministic parameter init matching the PyTorch module's shapes."""
    k_tok, k_pos, k_w, k_b = jax.random.split(key, 4)
    tok_table = jax.random.normal(k_tok, (vocab_size, embedding_dim), jnp.float32)
    pos_table = jax.random.normal(k_pos, (block_size, embedding_dim), jnp.float32)
    # nn.Linear default: U(-1/sqrt(fan_in), 1/sqrt(fan_in))
    bound = 1.0 / (embedding_dim ** 0.5)
    lm_w = jax.random.uniform(k_w, (vocab_size, embedding_dim), jnp.float32,
                              minval=-bound, maxval=bound)
    lm_b = jax.random.uniform(k_b, (vocab_size,), jnp.float32,
                              minval=-bound, maxval=bound)
    return tok_table, pos_table, lm_w, lm_b


if __name__ == "__main__":
    vocab_size = 64
    block_size = 16
    embedding_dim = 32
    B, T = 2, 8

    key = jax.random.PRNGKey(0)
    k_params, k_idx = jax.random.split(key)
    tok_table, pos_table, lm_w, lm_b = init_params(
        k_params, vocab_size, block_size, embedding_dim)
    idx = jax.random.randint(k_idx, (B, T), 0, vocab_size, dtype=jnp.int32)

    # One-time layout prep (transpose + bf16 cast + tight lane-dense V pad).
    w_prep, b_prep = prepare_lm_head(lm_w, lm_b)

    fwd = jax.jit(functools.partial(minigpt_forward, vocab_size=vocab_size))
    logits = fwd(idx, tok_table, pos_table, w_prep, b_prep)
    logits = jax.block_until_ready(logits)

    # Pure-JAX f32 reference check of the forward semantics.
    tok_emb_ref = jnp.take(tok_table, idx, axis=0)
    x_ref = tok_emb_ref + pos_table[:T][None, :, :]
    logits_ref = jnp.einsum("bte,ve->btv", x_ref, lm_w) + lm_b[None, None, :]

    assert logits.shape == (B, T, vocab_size)
    # Tolerance accounts for the bf16 operand casts (f32 accumulate) in the kernel.
    assert jnp.allclose(logits, logits_ref, atol=2e-2, rtol=2e-2), \
        float(jnp.max(jnp.abs(logits - logits_ref)))

    print("KERNEL_OK")
</pallas_src>

<mosaic_0001>
module attributes {stable_mosaic.version = 11 : i64} {
  func.func @_lm_head_kernel(%arg0: i32, %arg1: i32, %arg2: memref<16x32xbf16, #tpu.memory_space<vmem>>, %arg3: memref<32x128xbf16, #tpu.memory_space<vmem>>, %arg4: memref<1x128xf32, #tpu.memory_space<vmem>>, %arg5: memref<16x128xf32, #tpu.memory_space<vmem>>) attributes {dimension_semantics = [#tpu.dimension_semantics<parallel>, #tpu.dimension_semantics<parallel>], iteration_bounds = array<i64: 1, 1>, scalar_prefetch = 0 : i64, scratch_operands = 0 : i64, tpu.core_type = #tpu.core_type<tc>, window_params = [{transform_indices = @transform_0, window_bounds = array<i64: 16, 32>}, {transform_indices = @transform_1, window_bounds = array<i64: 32, 128>}, {transform_indices = @transform_2, window_bounds = array<i64: 1, 128>}, {transform_indices = @transform_3, window_bounds = array<i64: 16, 128>}]} {
    %c0 = arith.constant 0 : index
    %c0_0 = arith.constant 0 : index
    %0 = vector.load %arg2[%c0, %c0_0] : memref<16x32xbf16, #tpu.memory_space<vmem>>, vector<16x32xbf16>
    %c0_1 = arith.constant 0 : index
    %c0_2 = arith.constant 0 : index
    %1 = vector.load %arg3[%c0_1, %c0_2] : memref<32x128xbf16, #tpu.memory_space<vmem>>, vector<32x128xbf16>
    %cst = arith.constant dense<0.000000e+00> : vector<16x128xf32>
    %2 = tpu.matmul %0, %1, %cst {dimension_numbers = #tpu.dot_dimension_numbers<[1], [0], [0], [1], [0, 0, 1, 1], [], []>} : vector<16x32xbf16>, vector<32x128xbf16>, vector<16x128xf32> -> vector<16x128xf32>
    %c0_3 = arith.constant 0 : index
    %c0_4 = arith.constant 0 : index
    %3 = vector.load %arg4[%c0_3, %c0_4] : memref<1x128xf32, #tpu.memory_space<vmem>>, vector<1x128xf32>
    %4 = vector.broadcast %3 : vector<1x128xf32> to vector<16x128xf32>
    %5 = arith.addf %2, %4 : vector<16x128xf32>
    %c0_5 = arith.constant 0 : index
    %c0_6 = arith.constant 0 : index
    %6 = vector.load %arg5[%c0_5, %c0_6] : memref<16x128xf32, #tpu.memory_space<vmem>>, vector<16x128xf32>
    tpu.vector_store %arg5[%c0_5, %c0_6], %5 {strides = array<i32>} : memref<16x128xf32, #tpu.memory_space<vmem>>, vector<16x128xf32>,
    return
  }
  func.func @transform_0(%arg0: i32, %arg1: i32) -> (i32, i32) {
    %c0_i32 = arith.constant 0 : i32
    %c0_i32_0 = arith.constant 0 : i32
    return %arg1, %c0_i32 : i32, i32
  }
  func.func @transform_1(%arg0: i32, %arg1: i32) -> (i32, i32) {
    %c0_i32 = arith.constant 0 : i32
    %c0_i32_0 = arith.constant 0 : i32
    return %c0_i32, %arg0 : i32, i32
  }
  func.func @transform_2(%arg0: i32, %arg1: i32) -> (i32, i32) {
    %c0_i32 = arith.constant 0 : i32
    %c0_i32_0 = arith.constant 0 : i32
    return %c0_i32, %arg0 : i32, i32
  }
  func.func @transform_3(%arg0: i32, %arg1: i32) -> (i32, i32) {
    %c0_i32 = arith.constant 0 : i32
    return %arg1, %arg0 : i32, i32
  }
}

</mosaic_0001>

<llo_original>
// kernel: minigpt_forward.1
$region0: #{minigpt_forward.1}
  #allocation0 [shape = 'u32[]', space=smem, size = 0x4, offset = 0x4, fixed_abs, tag = 'smem constant byte address 0x4 - core index']
  #allocation1 [shape = 'u32[144,128]{1,0:T(1,128)}', space=vmem, size = 0x12000, scoped, tag = 'internal scratch']
  %s0 = inlined_call_operand.vmem [shape: bf16[16,32], index: 0, kind: input, shape index: {}]
  %s1 = inlined_call_operand.vmem [shape: bf16[32,128], index: 1, kind: input, shape index: {}]
  %s2 = inlined_call_operand.vmem [shape: f32[1,128], index: 2, kind: input, shape index: {}]
  %s3 = inlined_call_operand.vmem [shape: f32[16,128], index: 3, kind: output, shape index: {}]
  %s4 = sld [smem:[#allocation0]]
  $region22: #{minigpt_forward.1} parent=0
    _
  %s6 = ssub.s32 1, %s4
  %s7 = scalar_select 0, %s6, %s4
  // Predicated region
  $region2: #{minigpt_forward.1} parent=0 // pred_check
    _
  $region3: #{minigpt_forward.1} parent=0 // pred_check_branch
    %9 = sbr.rel (0) target = $region5
  $region4: #{minigpt_forward.1} parent=0 // pred_region
    _
  $region5: #{minigpt_forward.1} parent=0 // pred_fallthru
    _
  // Predicated region
  $region6: #{minigpt_forward.1} parent=0 // pred_check
    _
  $region7: #{minigpt_forward.1} parent=0 // pred_check_branch
    %11 = sbr.rel (0) target = $region9
  $region8: #{minigpt_forward.1} parent=0 // pred_region
    _
  $region9: #{minigpt_forward.1} parent=0 // pred_fallthru
    _
  // Predicated region
  $region10: #{minigpt_forward.1} parent=0 // pred_check
    _
  $region11: #{minigpt_forward.1} parent=0 // pred_check_branch
    %13 = sbr.rel (0) target = $region13
  $region12: #{minigpt_forward.1} parent=0 // pred_region
    _
  $region13: #{minigpt_forward.1} parent=0 // pred_fallthru
    _
  %v15 = vld [vmem:[%s0] sm:$0xf]
  %v16 = vld [vmem:[%s0 + $0x4] sm:$0xf]
  %v17 = vld [vmem:[%s1] sm:$0xf]
  %v18 = vld [vmem:[%s1 + $0x4] sm:$0xf]
  %v19 = vld [vmem:[%s1 + $0x8] sm:$0xf]
  %v20 = vld [vmem:[%s1 + $0xc] sm:$0xf]
  %v21 = vld [vmem:[%s2] sm:$0x1]
  %v23 = vlaneseq
  %v24 = vshrl.u32 %v23, 7
  %v25 = vsub.s32 0, %v24
  %v26 = vrot.slane %v21, %v25
  %v30 = vunpack.c.l.b16 %v15
  %v31 = vunpack.c.l.b16 %v16
  %v32 = vpack.c.b16 %v31, %v30
  %v37 = vunpack.c.l.b16 %v17
  %v38 = vunpack.c.l.b16 %v18
  %v39 = vunpack.c.l.b16 %v19
  %v40 = vunpack.c.l.b16 %v20
  %v41 = vpack.c.b16 %v38, %v37
  %v42 = vpack.c.b16 %v40, %v39
  %vm45 = vcmask 261120
  %v47 = vsel %vm45, %v32, 0
  %49 = vmatprep.subr.bf16.mxu0 0
  %50 = vmatpush1.bf16.msra.mxu0 0
  %51 = vmatprep.subr.bf16.mxu0 0
  %52 = vmatpush1.bf16.msra.mxu0 0
  %53 = vmatprep.subr.bf16.mxu0 0
  %54 = vmatpush1.bf16.msra.mxu0 0
  %55 = vmatprep.subr.bf16.mxu0 0
  %56 = vmatpush1.bf16.msra.mxu0 0
  %57 = vmatprep.subr.bf16.mxu0 0
  %58 = vmatpush1.bf16.msra.mxu0 0
  %59 = vmatprep.subr.bf16.mxu0 0
  %60 = vmatpush1.bf16.msra.mxu0 0
  %61 = vmatprep.subr.bf16.mxu0 0
  %62 = vmatpush1.bf16.msra.mxu0 %v42
  %63 = vmatprep.subr.bf16.mxu0 0
  %64 = vmatpush1.bf16.msra.mxu0 %v41
  %65 = vmatprep.subr.bf16.mxu0 0
  %66 = vmatpush2.bf16.msra.mxu0 0
  %67 = vmatprep.subr.bf16.mxu0 0
  %68 = vmatpush2.bf16.msra.mxu0 0
  %69 = vmatprep.subr.bf16.mxu0 0
  %70 = vmatpush2.bf16.msra.mxu0 0
  %71 = vmatprep.subr.bf16.mxu0 0
  %72 = vmatpush2.bf16.msra.mxu0 0
  %73 = vmatprep.subr.bf16.mxu0 0
  %74 = vmatpush2.bf16.msra.mxu0 0
  %75 = vmatprep.subr.bf16.mxu0 0
  %76 = vmatpush2.bf16.msra.mxu0 0
  %77 = vmatprep.subr.bf16.mxu0 0
  %78 = vmatpush2.bf16.msra.mxu0 0
  %79 = vmatprep.subr.bf16.mxu0 0
  %80 = vmatpush2.bf16.msra.mxu0 0
  %81 = vmatprep.mubr.bf16.mxu0 0
  %82 = vmatmul.mubr.bf16.gmra.mxu0 %v47
  %v83 = vpop.f32.mrf.mxu0
  %v84 = vadd.f32 %v26, %v83
  %v85 = vpop.f32.mrf.mxu0
  %v86 = vpop.f32.mrf.mxu0
  %v87 = vadd.f32 %v26, %v86
  %v88 = vpop.f32.mrf.mxu0
  %89 = vdwg.mxu0
  %90 = vst [vmem:[%s3] sm:$0xff] %v84
  %91 = vst [vmem:[%s3 + $0x8] sm:$0xff] %v87
  // Predicated region
  $region14: #{minigpt_forward.1} parent=0 // pred_check
    _
  $region15: #{minigpt_forward.1} parent=0 // pred_check_branch
    %93 = sbr.rel (0) target = $region17
  $region16: #{minigpt_forward.1} parent=0 // pred_region
    _
  $region17: #{minigpt_forward.1} parent=0 // pred_fallthru
    _
  // Predicated region
  $region18: #{minigpt_forward.1} parent=0 // pred_check
    _
  $region19: #{minigpt_forward.1} parent=0 // pred_check_branch
    %95 = sbr.rel (0) target = $region21
  $region20: #{minigpt_forward.1} parent=0 // pred_region
    _
  $region21: #{minigpt_forward.1} parent=0 // pred_fallthru
    _

</llo_original>
